<compile_context>
chip_gen: v7x
topology: tpu7x:2x2x1
jax: 0.10.0
libtpu: 0.0.40
codegen_flags: <defaults>
</compile_context>

<pallas_src>
import numpy as np
import jax
import jax.numpy as jnp
from jax import lax
from jax.experimental import pallas as pl
from jax.experimental.pallas import tpu as pltpu

IMPOSSIBLE = -10000.0


def crf_viterbi_kernel(feat_ref, mask_ref, wt_ref, b_ref, transT_ref,
                       score_ref, tag_ref, path_ref,
                       emit_ref, bp_ref):
    # Per grid step (one block of Bblk sequences, batch on lanes):
    #   feat_ref:   [Bblk*L, D] f32   (rows are batch-major, time-minor)
    #   mask_ref:   [L, Bblk]   f32
    #   wt_ref:     [D, C]      f32   b_ref: [1, C] f32
    #   transT_ref: [C, C]      f32   transT[i, j] = transitions[j, i]
    #   score_ref:  [1, Bblk]   f32   tag_ref: [1, Bblk] i32   path_ref: [L, Bblk] i32
    #   emit_ref:   [Bblk*L, C] f32   VMEM scratch (emissions)
    #   bp_ref:     [L, C, Bblk] i32  VMEM scratch (backpointers)
    L, Bblk = mask_ref.shape
    _, C = wt_ref.shape
    start_idx = C - 2
    stop_idx = C - 1

    # ---------------- emissions: one MXU matmul for the whole block ----------------
    # (bf16 cast happens in-kernel; f32 accumulation)
    emit_ref[...] = jnp.dot(feat_ref[...].astype(jnp.bfloat16),
                            wt_ref[...].astype(jnp.bfloat16),
                            preferred_element_type=jnp.float32) + b_ref[...]

    # ---------------- hoisted loop invariants ----------------
    transT = transT_ref[...]                                            # [C, C]
    sub_c = lax.broadcasted_iota(jnp.int32, (C, Bblk), 0)               # tag id per sublane row
    m0 = jnp.where(sub_c == start_idx, 0.0, IMPOSSIBLE).astype(jnp.float32)  # [C, Bblk]

    # ---------------- Viterbi forward recursion (serial in t, vector over lanes) ---
    def fwd_body(t, m):
        best_rows, bp_rows = [], []
        for j in range(C):                       # static, small destination-tag loop
            # tmp[i, b] = m[i, b] + transitions[j, i]
            tmp = m + transT[:, j:j + 1]                                 # [C, Bblk]
            best_j = jnp.max(tmp, axis=0, keepdims=True)                 # [1, Bblk]
            bp_j = jnp.min(jnp.where(tmp == best_j, sub_c, C),
                           axis=0, keepdims=True)                        # [1, Bblk]
            best_rows.append(best_j)
            bp_rows.append(bp_j)
        best = jnp.concatenate(best_rows, axis=0)                        # [C, Bblk]
        bp = jnp.concatenate(bp_rows, axis=0).astype(jnp.int32)          # [C, Bblk]
        bp_ref[t] = bp

        # emissions for step t: rows {b*L + t} of the scratch, then a small 2D transpose
        emit_bt = emit_ref[pl.ds(t, Bblk, stride=L), :]                  # [Bblk, C]
        score = best + jnp.transpose(emit_bt)                            # [C, Bblk]

        gate = mask_ref[pl.ds(t, 1), :] > 0.0                            # [1, Bblk]
        return jnp.where(gate, score, m)                                 # single select

    m_final = lax.fori_loop(0, L, fwd_body, m0)

    final = m_final + transT[:, stop_idx:stop_idx + 1]                   # [C, Bblk]
    best_score = jnp.max(final, axis=0, keepdims=True)                   # [1, Bblk]
    best_tag = jnp.min(jnp.where(final == best_score, sub_c, C),
                       axis=0, keepdims=True).astype(jnp.int32)          # [1, Bblk]
    score_ref[...] = best_score
    tag_ref[...] = best_tag

    # ---------------- in-kernel backtracking, vectorized across lanes ----------------
    seq_len = jnp.sum(mask_ref[...], axis=0, keepdims=True).astype(jnp.int32)  # [1, Bblk]

    def bwd_body(i, cur):
        t = L - 1 - i
        tp1 = jnp.minimum(t + 1, L - 1)          # clamped; value unused when t == L-1
        bp_next = bp_ref[tp1]                                            # [C, Bblk]
        # one-hot gather over the C sublanes: from_bp[b] = bp_next[cur[b], b]
        from_bp = jnp.sum(jnp.where(sub_c == cur, bp_next, 0),
                          axis=0, keepdims=True)                         # [1, Bblk]
        nxt = jnp.where(seq_len - 1 == t, best_tag, from_bp)
        cur_new = jnp.where(seq_len > t, nxt, jnp.zeros_like(nxt))
        path_ref[pl.ds(t, 1), :] = cur_new                               # lane-dense row store
        return cur_new

    lax.fori_loop(0, L, bwd_body, jnp.zeros((1, Bblk), jnp.int32))


def _round_up(x, m):
    return (x + m - 1) // m * m


def crf_forward(features, masks, fc_weight, fc_bias, transitions, *, block_b=None):
    """Mirrors CRF.forward(features, masks) -> (best_score [B], best_paths list)."""
    B, L, D = features.shape
    C = transitions.shape[0]
    masks_f = masks[:, :L].astype(jnp.float32)
    seq_lengths = jnp.sum(masks_f, axis=1).astype(jnp.int32)    # for host-side trimming

    # ---- batch block size: up to 128 sequences on the lane axis per grid step,
    #      capped by a conservative VMEM budget (double-buffered feature tile +
    #      lane-padded emission scratch + backpointers) valid on v5e/v6e/v7x.
    if block_b is None:
        vmem_budget = 12 << 20
        per_seq = 2 * L * D * features.dtype.itemsize + L * 128 * 4 + L * 8 * 4
        block_b = min(128, max(8, (vmem_budget // max(per_seq, 1)) // 8 * 8))
    Bblk = int(min(block_b, _round_up(B, 8)))
    n_blocks = -(-B // Bblk)
    B_pad = n_blocks * Bblk

    if B_pad != B:
        pad = B_pad - B
        features = jnp.pad(features, ((0, pad), (0, 0), (0, 0)))
        masks_f = jnp.pad(masks_f, ((0, pad), (0, 0)))

    feat2d = features.reshape(B_pad * L, D)                      # free row-major view
    mask_blk = jnp.transpose(masks_f.reshape(n_blocks, Bblk, L), (0, 2, 1))  # [nB, L, Bblk]

    score3, tag3, path3 = pl.pallas_call(
        crf_viterbi_kernel,
        grid=(n_blocks,),
        in_specs=[
            pl.BlockSpec((Bblk * L, D), lambda g: (g, 0)),          # features (flattened)
            pl.BlockSpec((None, L, Bblk), lambda g: (g, 0, 0)),     # masks (time, batch-lane)
            pl.BlockSpec((D, C), lambda g: (0, 0)),                 # fc weight^T
            pl.BlockSpec((1, C), lambda g: (0, 0)),                 # fc bias
            pl.BlockSpec((C, C), lambda g: (0, 0)),                 # transitions^T
        ],
        out_specs=(
            pl.BlockSpec((None, 1, Bblk), lambda g: (g, 0, 0)),     # best score
            pl.BlockSpec((None, 1, Bblk), lambda g: (g, 0, 0)),     # best tag
            pl.BlockSpec((None, L, Bblk), lambda g: (g, 0, 0)),     # decoded path
        ),
        out_shape=(
            jax.ShapeDtypeStruct((n_blocks, 1, Bblk), jnp.float32),
            jax.ShapeDtypeStruct((n_blocks, 1, Bblk), jnp.int32),
            jax.ShapeDtypeStruct((n_blocks, L, Bblk), jnp.int32),
        ),
        scratch_shapes=[
            pltpu.VMEM((Bblk * L, C), jnp.float32),                 # emissions
            pltpu.VMEM((L, C, Bblk), jnp.int32),                    # backpointers
        ],
        compiler_params=pltpu.CompilerParams(
            dimension_semantics=("parallel",),
            vmem_limit_bytes=32 * 1024 * 1024),
    )(
        feat2d,                                       # native dtype; bf16 cast in-kernel
        mask_blk,
        jnp.transpose(fc_weight).astype(jnp.float32),
        fc_bias.reshape(1, C).astype(jnp.float32),
        jnp.transpose(transitions).astype(jnp.float32),
    )

    best_score = score3.reshape(B_pad)[:B]
    paths = jnp.transpose(path3, (0, 2, 1)).reshape(B_pad, L)[:B]

    # TODO(synk): the module returns variable-length Python lists; trimming the fixed
    # [B, L] in-kernel decode to per-sequence lengths is host-side glue by necessity.
    lengths_np = np.asarray(seq_lengths)
    paths_np = np.asarray(paths)
    best_paths = [paths_np[b, :int(lengths_np[b])].tolist() for b in range(B)]
    return best_score, best_paths


# ----------------------------- numpy reference (for self-check) -----------------------------
def _reference_viterbi(features, masks, fc_weight, fc_bias, transitions):
    """Pure numpy Viterbi; emissions use the same bf16-cast matmul operands as the kernel."""
    feats = np.asarray(jnp.asarray(features).astype(jnp.bfloat16).astype(jnp.float32))
    w = np.asarray(jnp.asarray(fc_weight).astype(jnp.bfloat16).astype(jnp.float32))
    b = np.asarray(fc_bias, dtype=np.float32)
    trans = np.asarray(transitions, dtype=np.float32)
    masks = np.asarray(masks, dtype=np.float32)
    B, L, D = feats.shape
    C = trans.shape[0]
    start_idx, stop_idx = C - 2, C - 1
    emit = feats @ w.T + b                                    # [B, L, C]
    scores, paths = [], []
    for bi in range(B):
        L_b = int(masks[bi].sum())
        ms = np.full((C,), IMPOSSIBLE, np.float32)
        ms[start_idx] = 0.0
        bps = np.zeros((L, C), np.int64)
        for t in range(L):
            acc = ms[None, :] + trans                         # [C, C]
            bps[t] = acc.argmax(-1)
            st = acc.max(-1) + emit[bi, t]
            if masks[bi, t] > 0:
                ms = st
        final = ms + trans[stop_idx]
        scores.append(float(final.max()))
        tag = int(final.argmax())
        path = [tag]
        for t in range(L_b - 1, 0, -1):
            tag = int(bps[t, tag])
            path.append(tag)
        paths.append(path[::-1] if L_b > 0 else [])
    return np.asarray(scores, np.float32), paths, emit


def _path_score(emit_b, trans, path, start_idx, stop_idx):
    s, prev = 0.0, start_idx
    for t, tag in enumerate(path):
        s += float(trans[tag, prev]) + float(emit_b[t, tag])
        prev = tag
    return s + float(trans[stop_idx, prev])


if __name__ == "__main__":
    # Small shapes consistent with the module's forward.
    B, L, D = 3, 16, 32         # batch, seq, in_features
    num_tags_user = 6
    C = num_tags_user + 2       # internal tag space incl. START, STOP
    start_idx, stop_idx = C - 2, C - 1

    key = jax.random.PRNGKey(0)
    k_feat, k_w, k_b, k_trans = jax.random.split(key, 4)

    features = jax.random.normal(k_feat, (B, L, D), dtype=jnp.float32)
    fc_weight = jax.random.normal(k_w, (C, D), dtype=jnp.float32) / jnp.sqrt(D)
    fc_bias = jax.random.normal(k_b, (C,), dtype=jnp.float32) * 0.01
    transitions = jax.random.normal(k_trans, (C, C), dtype=jnp.float32)
    transitions = transitions.at[start_idx, :].set(IMPOSSIBLE)
    transitions = transitions.at[:, stop_idx].set(IMPOSSIBLE)

    # masks: contiguous prefixes of different lengths (one full, two padded).
    lengths = jnp.array([L, 9, 4], dtype=jnp.int32)
    masks = (jnp.arange(L)[None, :] < lengths[:, None]).astype(jnp.float32)

    best_score, best_paths = crf_forward(features, masks,
                                         fc_weight, fc_bias, transitions)
    best_score = jax.block_until_ready(best_score)

    # Self-check against a pure numpy Viterbi reference.
    ref_score, ref_paths, ref_emit = _reference_viterbi(
        features, masks, fc_weight, fc_bias, transitions)
    trans_np = np.asarray(transitions, np.float32)
    bs = np.asarray(best_score)

    assert bs.shape == (B,)
    assert np.all(np.isfinite(bs))
    assert np.allclose(bs, ref_score, rtol=1e-3, atol=1e-2), (bs, ref_score)
    assert len(best_paths) == B
    masks_np = np.asarray(masks)
    for b in range(B):
        L_b = int(masks_np[b].sum())
        assert len(best_paths[b]) == L_b
        assert all(0 <= t < C for t in best_paths[b])
        # the decoded path must actually achieve the reported best score
        ps = _path_score(ref_emit[b], trans_np, best_paths[b], start_idx, stop_idx)
        assert abs(ps - float(bs[b])) < 1e-2, (b, ps, float(bs[b]))

    print("KERNEL_OK")
</pallas_src>

<mosaic_0001>
module attributes {stable_mosaic.version = 11 : i64} {
  func.func @crf_viterbi_kernel(%arg0: i32, %arg1: memref<128x32xf32, #tpu.memory_space<vmem>>, %arg2: memref<1x16x8xf32, #tpu.memory_space<vmem>>, %arg3: memref<32x8xf32, #tpu.memory_space<vmem>>, %arg4: memref<1x8xf32, #tpu.memory_space<vmem>>, %arg5: memref<8x8xf32, #tpu.memory_space<vmem>>, %arg6: memref<1x1x8xf32, #tpu.memory_space<vmem>>, %arg7: memref<1x1x8xi32, #tpu.memory_space<vmem>>, %arg8: memref<1x16x8xi32, #tpu.memory_space<vmem>>, %arg9: memref<128x8xf32, #tpu.memory_space<vmem>>, %arg10: memref<16x8x8xi32, #tpu.memory_space<vmem>>) attributes {dimension_semantics = [#tpu.dimension_semantics<parallel>], iteration_bounds = array<i64: 1>, scalar_prefetch = 0 : i64, scratch_operands = 2 : i64, tpu.core_type = #tpu.core_type<tc>, window_params = [{transform_indices = @transform_0, window_bounds = array<i64: 128, 32>}, {transform_indices = @transform_1, window_bounds = array<i64: 1, 16, 8>}, {pipeline_mode = #tpu.pipeline_mode<synchronous>, transform_indices = @transform_2, window_bounds = array<i64: 32, 8>}, {pipeline_mode = #tpu.pipeline_mode<synchronous>, transform_indices = @transform_3, window_bounds = array<i64: 1, 8>}, {pipeline_mode = #tpu.pipeline_mode<synchronous>, transform_indices = @transform_4, window_bounds = array<i64: 8, 8>}, {transform_indices = @transform_5, window_bounds = array<i64: 1, 1, 8>}, {transform_indices = @transform_6, window_bounds = array<i64: 1, 1, 8>}, {transform_indices = @transform_7, window_bounds = array<i64: 1, 16, 8>}]} {
    %c0 = arith.constant 0 : index
    %c0_0 = arith.constant 0 : index
    %0 = vector.load %arg1[%c0, %c0_0] : memref<128x32xf32, #tpu.memory_space<vmem>>, vector<128x32xf32>
    %1 = arith.truncf %0 : vector<128x32xf32> to vector<128x32xbf16>
    %c0_1 = arith.constant 0 : index
    %c0_2 = arith.constant 0 : index
    %2 = vector.load %arg3[%c0_1, %c0_2] : memref<32x8xf32, #tpu.memory_space<vmem>>, vector<32x8xf32>
    %3 = arith.truncf %2 : vector<32x8xf32> to vector<32x8xbf16>
    %cst = arith.constant dense<0.000000e+00> : vector<128x8xf32>
    %4 = tpu.matmul %1, %3, %cst {dimension_numbers = #tpu.dot_dimension_numbers<[1], [0], [0], [1], [0, 0, 1, 1], [], []>} : vector<128x32xbf16>, vector<32x8xbf16>, vector<128x8xf32> -> vector<128x8xf32>
    %c0_3 = arith.constant 0 : index
    %c0_4 = arith.constant 0 : index
    %5 = vector.load %arg4[%c0_3, %c0_4] : memref<1x8xf32, #tpu.memory_space<vmem>>, vector<1x8xf32>
    %6 = vector.broadcast %5 : vector<1x8xf32> to vector<128x8xf32>
    %7 = arith.addf %4, %6 : vector<128x8xf32>
    %c0_5 = arith.constant 0 : index
    %c0_6 = arith.constant 0 : index
    %8 = vector.load %arg9[%c0_5, %c0_6] : memref<128x8xf32, #tpu.memory_space<vmem>>, vector<128x8xf32>
    tpu.vector_store %arg9[%c0_5, %c0_6], %7 {strides = array<i32>} : memref<128x8xf32, #tpu.memory_space<vmem>>, vector<128x8xf32>,
    %c0_7 = arith.constant 0 : index
    %c0_8 = arith.constant 0 : index
    %9 = vector.load %arg5[%c0_7, %c0_8] : memref<8x8xf32, #tpu.memory_space<vmem>>, vector<8x8xf32>
    %10 = tpu.iota {dimensions = array<i32: 0>} : vector<8x8xi32>
    %c6_i32 = arith.constant 6 : i32
    %11 = vector.broadcast %c6_i32 : i32 to vector<8x8xi32>
    %12 = arith.cmpi eq, %10, %11 : vector<8x8xi32>
    %cst_9 = arith.constant 0.000000e+00 : f32
    %cst_10 = arith.constant -1.000000e+04 : f32
    %13 = vector.broadcast %cst_9 : f32 to vector<8x8xf32>
    %14 = vector.broadcast %cst_10 : f32 to vector<8x8xf32>
    %15 = arith.select %12, %13, %14 : vector<8x8xi1>, vector<8x8xf32>
    %c0_i32 = arith.constant 0 : i32
    %c16_i32 = arith.constant 16 : i32
    %16 = arith.addi %c0_i32, %c16_i32 : i32
    %c1_i32 = arith.constant 1 : i32
    %17 = scf.for %arg11 = %c0_i32 to %16 step %c1_i32 iter_args(%arg12 = %15) -> (vector<8x8xf32>)  : i32 {
      %43 = vector.extract_strided_slice %9 {offsets = [0, 0], sizes = [8, 1], strides = [1, 1]} : vector<8x8xf32> to vector<8x1xf32>
      %44 = vector.broadcast %43 : vector<8x1xf32> to vector<8x8xf32>
      %45 = arith.addf %arg12, %44 : vector<8x8xf32>
      %cst_29 = arith.constant dense<0xFF800000> : vector<8xf32>
      %46 = vector.multi_reduction <maximumf>, %45, %cst_29 [0] : vector<8x8xf32> to vector<8xf32>
      %47 = vector.shape_cast %46 : vector<8xf32> to vector<1x8xf32>
      %48 = vector.broadcast %47 : vector<1x8xf32> to vector<8x8xf32>
      %49 = arith.cmpf oeq, %45, %48 : vector<8x8xf32>
      %c8_i32_30 = arith.constant 8 : i32
      %50 = vector.broadcast %c8_i32_30 : i32 to vector<8x8xi32>
      %51 = arith.select %49, %10, %50 : vector<8x8xi1>, vector<8x8xi32>
      %cst_31 = arith.constant dense<2147483647> : vector<8xi32>
      %52 = vector.multi_reduction <minsi>, %51, %cst_31 [0] : vector<8x8xi32> to vector<8xi32>
      %53 = vector.shape_cast %52 : vector<8xi32> to vector<1x8xi32>
      %54 = vector.extract_strided_slice %9 {offsets = [0, 1], sizes = [8, 1], strides = [1, 1]} : vector<8x8xf32> to vector<8x1xf32>
      %55 = vector.broadcast %54 : vector<8x1xf32> to vector<8x8xf32>
      %56 = arith.addf %arg12, %55 : vector<8x8xf32>
      %cst_32 = arith.constant dense<0xFF800000> : vector<8xf32>
      %57 = vector.multi_reduction <maximumf>, %56, %cst_32 [0] : vector<8x8xf32> to vector<8xf32>
      %58 = vector.shape_cast %57 : vector<8xf32> to vector<1x8xf32>
      %59 = vector.broadcast %58 : vector<1x8xf32> to vector<8x8xf32>
      %60 = arith.cmpf oeq, %56, %59 : vector<8x8xf32>
      %c8_i32_33 = arith.constant 8 : i32
      %61 = vector.broadcast %c8_i32_33 : i32 to vector<8x8xi32>
      %62 = arith.select %60, %10, %61 : vector<8x8xi1>, vector<8x8xi32>
      %cst_34 = arith.constant dense<2147483647> : vector<8xi32>
      %63 = vector.multi_reduction <minsi>, %62, %cst_34 [0] : vector<8x8xi32> to vector<8xi32>
      %64 = vector.shape_cast %63 : vector<8xi32> to vector<1x8xi32>
      %65 = vector.extract_strided_slice %9 {offsets = [0, 2], sizes = [8, 1], strides = [1, 1]} : vector<8x8xf32> to vector<8x1xf32>
      %66 = vector.broadcast %65 : vector<8x1xf32> to vector<8x8xf32>
      %67 = arith.addf %arg12, %66 : vector<8x8xf32>
      %cst_35 = arith.constant dense<0xFF800000> : vector<8xf32>
      %68 = vector.multi_reduction <maximumf>, %67, %cst_35 [0] : vector<8x8xf32> to vector<8xf32>
      %69 = vector.shape_cast %68 : vector<8xf32> to vector<1x8xf32>
      %70 = vector.broadcast %69 : vector<1x8xf32> to vector<8x8xf32>
      %71 = arith.cmpf oeq, %67, %70 : vector<8x8xf32>
      %c8_i32_36 = arith.constant 8 : i32
      %72 = vector.broadcast %c8_i32_36 : i32 to vector<8x8xi32>
      %73 = arith.select %71, %10, %72 : vector<8x8xi1>, vector<8x8xi32>
      %cst_37 = arith.constant dense<2147483647> : vector<8xi32>
      %74 = vector.multi_reduction <minsi>, %73, %cst_37 [0] : vector<8x8xi32> to vector<8xi32>
      %75 = vector.shape_cast %74 : vector<8xi32> to vector<1x8xi32>
      %76 = vector.extract_strided_slice %9 {offsets = [0, 3], sizes = [8, 1], strides = [1, 1]} : vector<8x8xf32> to vector<8x1xf32>
      %77 = vector.broadcast %76 : vector<8x1xf32> to vector<8x8xf32>
      %78 = arith.addf %arg12, %77 : vector<8x8xf32>
      %cst_38 = arith.constant dense<0xFF800000> : vector<8xf32>
      %79 = vector.multi_reduction <maximumf>, %78, %cst_38 [0] : vector<8x8xf32> to vector<8xf32>
      %80 = vector.shape_cast %79 : vector<8xf32> to vector<1x8xf32>
      %81 = vector.broadcast %80 : vector<1x8xf32> to vector<8x8xf32>
      %82 = arith.cmpf oeq, %78, %81 : vector<8x8xf32>
      %c8_i32_39 = arith.constant 8 : i32
      %83 = vector.broadcast %c8_i32_39 : i32 to vector<8x8xi32>
      %84 = arith.select %82, %10, %83 : vector<8x8xi1>, vector<8x8xi32>
      %cst_40 = arith.constant dense<2147483647> : vector<8xi32>
      %85 = vector.multi_reduction <minsi>, %84, %cst_40 [0] : vector<8x8xi32> to vector<8xi32>
      %86 = vector.shape_cast %85 : vector<8xi32> to vector<1x8xi32>
      %87 = vector.extract_strided_slice %9 {offsets = [0, 4], sizes = [8, 1], strides = [1, 1]} : vector<8x8xf32> to vector<8x1xf32>
      %88 = vector.broadcast %87 : vector<8x1xf32> to vector<8x8xf32>
      %89 = arith.addf %arg12, %88 : vector<8x8xf32>
      %cst_41 = arith.constant dense<0xFF800000> : vector<8xf32>
      %90 = vector.multi_reduction <maximumf>, %89, %cst_41 [0] : vector<8x8xf32> to vector<8xf32>
      %91 = vector.shape_cast %90 : vector<8xf32> to vector<1x8xf32>
      %92 = vector.broadcast %91 : vector<1x8xf32> to vector<8x8xf32>
      %93 = arith.cmpf oeq, %89, %92 : vector<8x8xf32>
      %c8_i32_42 = arith.constant 8 : i32
      %94 = vector.broadcast %c8_i32_42 : i32 to vector<8x8xi32>
      %95 = arith.select %93, %10, %94 : vector<8x8xi1>, vector<8x8xi32>
      %cst_43 = arith.constant dense<2147483647> : vector<8xi32>
      %96 = vector.multi_reduction <minsi>, %95, %cst_43 [0] : vector<8x8xi32> to vector<8xi32>
      %97 = vector.shape_cast %96 : vector<8xi32> to vector<1x8xi32>
      %98 = vector.extract_strided_slice %9 {offsets = [0, 5], sizes = [8, 1], strides = [1, 1]} : vector<8x8xf32> to vector<8x1xf32>
      %99 = vector.broadcast %98 : vector<8x1xf32> to vector<8x8xf32>
      %100 = arith.addf %arg12, %99 : vector<8x8xf32>
      %cst_44 = arith.constant dense<0xFF800000> : vector<8xf32>
      %101 = vector.multi_reduction <maximumf>, %100, %cst_44 [0] : vector<8x8xf32> to vector<8xf32>
      %102 = vector.shape_cast %101 : vector<8xf32> to vector<1x8xf32>
      %103 = vector.broadcast %102 : vector<1x8xf32> to vector<8x8xf32>
      %104 = arith.cmpf oeq, %100, %103 : vector<8x8xf32>
      %c8_i32_45 = arith.constant 8 : i32
      %105 = vector.broadcast %c8_i32_45 : i32 to vector<8x8xi32>
      %106 = arith.select %104, %10, %105 : vector<8x8xi1>, vector<8x8xi32>
      %cst_46 = arith.constant dense<2147483647> : vector<8xi32>
      %107 = vector.multi_reduction <minsi>, %106, %cst_46 [0] : vector<8x8xi32> to vector<8xi32>
      %108 = vector.shape_cast %107 : vector<8xi32> to vector<1x8xi32>
      %109 = vector.extract_strided_slice %9 {offsets = [0, 6], sizes = [8, 1], strides = [1, 1]} : vector<8x8xf32> to vector<8x1xf32>
      %110 = vector.broadcast %109 : vector<8x1xf32> to vector<8x8xf32>
      %111 = arith.addf %arg12, %110 : vector<8x8xf32>
      %cst_47 = arith.constant dense<0xFF800000> : vector<8xf32>
      %112 = vector.multi_reduction <maximumf>, %111, %cst_47 [0] : vector<8x8xf32> to vector<8xf32>
      %113 = vector.shape_cast %112 : vector<8xf32> to vector<1x8xf32>
      %114 = vector.broadcast %113 : vector<1x8xf32> to vector<8x8xf32>
      %115 = arith.cmpf oeq, %111, %114 : vector<8x8xf32>
      %c8_i32_48 = arith.constant 8 : i32
      %116 = vector.broadcast %c8_i32_48 : i32 to vector<8x8xi32>
      %117 = arith.select %115, %10, %116 : vector<8x8xi1>, vector<8x8xi32>
      %cst_49 = arith.constant dense<2147483647> : vector<8xi32>
      %118 = vector.multi_reduction <minsi>, %117, %cst_49 [0] : vector<8x8xi32> to vector<8xi32>
      %119 = vector.shape_cast %118 : vector<8xi32> to vector<1x8xi32>
      %120 = vector.extract_strided_slice %9 {offsets = [0, 7], sizes = [8, 1], strides = [1, 1]} : vector<8x8xf32> to vector<8x1xf32>
      %121 = vector.broadcast %120 : vector<8x1xf32> to vector<8x8xf32>
      %122 = arith.addf %arg12, %121 : vector<8x8xf32>
      %cst_50 = arith.constant dense<0xFF800000> : vector<8xf32>
      %123 = vector.multi_reduction <maximumf>, %122, %cst_50 [0] : vector<8x8xf32> to vector<8xf32>
      %124 = vector.shape_cast %123 : vector<8xf32> to vector<1x8xf32>
      %125 = vector.broadcast %124 : vector<1x8xf32> to vector<8x8xf32>
      %126 = arith.cmpf oeq, %122, %125 : vector<8x8xf32>
      %c8_i32_51 = arith.constant 8 : i32
      %127 = vector.broadcast %c8_i32_51 : i32 to vector<8x8xi32>
      %128 = arith.select %126, %10, %127 : vector<8x8xi1>, vector<8x8xi32>
      %cst_52 = arith.constant dense<2147483647> : vector<8xi32>
      %129 = vector.multi_reduction <minsi>, %128, %cst_52 [0] : vector<8x8xi32> to vector<8xi32>
      %130 = vector.shape_cast %129 : vector<8xi32> to vector<1x8xi32>
      %131 = tpu.concatenate %47, %58, %69, %80, %91, %102, %113, %124 in 0 : vector<1x8xf32>, vector<1x8xf32>, vector<1x8xf32>, vector<1x8xf32>, vector<1x8xf32>, vector<1x8xf32>, vector<1x8xf32>, vector<1x8xf32> -> vector<8x8xf32>
      %132 = tpu.concatenate %53, %64, %75, %86, %97, %108, %119, %130 in 0 : vector<1x8xi32>, vector<1x8xi32>, vector<1x8xi32>, vector<1x8xi32>, vector<1x8xi32>, vector<1x8xi32>, vector<1x8xi32>, vector<1x8xi32> -> vector<8x8xi32>
      %133 = arith.index_cast %arg11 : i32 to index
      %c0_53 = arith.constant 0 : index
      %c0_54 = arith.constant 0 : index
      %134 = vector.load %arg10[%133, %c0_53, %c0_54] : memref<16x8x8xi32, #tpu.memory_space<vmem>>, vector<1x8x8xi32>
      %135 = vector.shape_cast %134 : vector<1x8x8xi32> to vector<8x8xi32>
      %136 = vector.shape_cast %132 : vector<8x8xi32> to vector<1x8x8xi32>
      tpu.vector_store %arg10[%133, %c0_53, %c0_54], %136 {strides = array<i32>} : memref<16x8x8xi32, #tpu.memory_space<vmem>>, vector<1x8x8xi32>,
      %137 = arith.index_cast %arg11 : i32 to index
      %c0_55 = arith.constant 0 : index
      %138 = tpu.strided_load %arg9[%137, %c0_55] {strides = array<i32: 16, 1>} : memref<128x8xf32, #tpu.memory_space<vmem>>, vector<8x8xf32>
      %139 = tpu.transpose %138, [1, 0] : vector<8x8xf32> -> vector<8x8xf32>
      %140 = arith.addf %131, %139 : vector<8x8xf32>
      %c0_56 = arith.constant 0 : index
      %141 = arith.index_cast %arg11 : i32 to index
      %c0_57 = arith.constant 0 : index
      %142 = vector.load %arg2[%c0_56, %141, %c0_57] : memref<1x16x8xf32, #tpu.memory_space<vmem>>, vector<1x1x8xf32>
      %143 = vector.shape_cast %142 : vector<1x1x8xf32> to vector<1x8xf32>
      %cst_58 = arith.constant 0.000000e+00 : f32
      %144 = vector.broadcast %cst_58 : f32 to vector<1x8xf32>
      %145 = arith.cmpf ogt, %143, %144 : vector<1x8xf32>
      %146 = vector.shape_cast %145 : vector<1x8xi1> to vector<1x8xi1>
      %147 = vector.broadcast %146 : vector<1x8xi1> to vector<8x8xi1>
      %148 = arith.select %147, %140, %arg12 : vector<8x8xi1>, vector<8x8xf32>
      scf.yield %148 : vector<8x8xf32>
    }
    %c16_i32_11 = arith.constant 16 : i32
    %18 = vector.extract_strided_slice %9 {offsets = [0, 7], sizes = [8, 1], strides = [1, 1]} : vector<8x8xf32> to vector<8x1xf32>
    %19 = vector.broadcast %18 : vector<8x1xf32> to vector<8x8xf32>
    %20 = arith.addf %17, %19 : vector<8x8xf32>
    %cst_12 = arith.constant dense<0xFF800000> : vector<8xf32>
    %21 = vector.multi_reduction <maximumf>, %20, %cst_12 [0] : vector<8x8xf32> to vector<8xf32>
    %22 = vector.shape_cast %21 : vector<8xf32> to vector<1x8xf32>
    %23 = vector.broadcast %22 : vector<1x8xf32> to vector<8x8xf32>
    %24 = arith.cmpf oeq, %20, %23 : vector<8x8xf32>
    %c8_i32 = arith.constant 8 : i32
    %25 = vector.broadcast %c8_i32 : i32 to vector<8x8xi32>
    %26 = arith.select %24, %10, %25 : vector<8x8xi1>, vector<8x8xi32>
    %cst_13 = arith.constant dense<2147483647> : vector<8xi32>
    %27 = vector.multi_reduction <minsi>, %26, %cst_13 [0] : vector<8x8xi32> to vector<8xi32>
    %28 = vector.shape_cast %27 : vector<8xi32> to vector<1x8xi32>
    %c0_14 = arith.constant 0 : index
    %c0_15 = arith.constant 0 : index
    %c0_16 = arith.constant 0 : index
    %29 = vector.load %arg6[%c0_14, %c0_15, %c0_16] : memref<1x1x8xf32, #tpu.memory_space<vmem>>, vector<1x1x8xf32>
    %30 = vector.shape_cast %29 : vector<1x1x8xf32> to vector<1x8xf32>
    %31 = vector.shape_cast %22 : vector<1x8xf32> to vector<1x1x8xf32>
    tpu.vector_store %arg6[%c0_14, %c0_15, %c0_16], %31 {strides = array<i32>} : memref<1x1x8xf32, #tpu.memory_space<vmem>>, vector<1x1x8xf32>,
    %c0_17 = arith.constant 0 : index
    %c0_18 = arith.constant 0 : index
    %c0_19 = arith.constant 0 : index
    %32 = vector.load %arg7[%c0_17, %c0_18, %c0_19] : memref<1x1x8xi32, #tpu.memory_space<vmem>>, vector<1x1x8xi32>
    %33 = vector.shape_cast %32 : vector<1x1x8xi32> to vector<1x8xi32>
    %34 = vector.shape_cast %28 : vector<1x8xi32> to vector<1x1x8xi32>
    tpu.vector_store %arg7[%c0_17, %c0_18, %c0_19], %34 {strides = array<i32>} : memref<1x1x8xi32, #tpu.memory_space<vmem>>, vector<1x1x8xi32>,
    %c0_20 = arith.constant 0 : index
    %c0_21 = arith.constant 0 : index
    %c0_22 = arith.constant 0 : index
    %35 = vector.load %arg2[%c0_20, %c0_21, %c0_22] : memref<1x16x8xf32, #tpu.memory_space<vmem>>, vector<1x16x8xf32>
    %36 = vector.shape_cast %35 : vector<1x16x8xf32> to vector<16x8xf32>
    %cst_23 = arith.constant dense<0.000000e+00> : vector<8xf32>
    %37 = vector.multi_reduction <add>, %36, %cst_23 [0] : vector<16x8xf32> to vector<8xf32>
    %38 = vector.shape_cast %37 : vector<8xf32> to vector<1x8xf32>
    %39 = arith.fptosi %38 : vector<1x8xf32> to vector<1x8xi32>
    %c0_i32_24 = arith.constant 0 : i32
    %40 = vector.broadcast %c0_i32_24 : i32 to vector<1x8xi32>
    %c0_i32_25 = arith.constant 0 : i32
    %c16_i32_26 = arith.constant 16 : i32
    %41 = arith.addi %c0_i32_25, %c16_i32_26 : i32
    %c1_i32_27 = arith.constant 1 : i32
    %42 = scf.for %arg11 = %c0_i32_25 to %41 step %c1_i32_27 iter_args(%arg12 = %40) -> (vector<1x8xi32>)  : i32 {
      %c15_i32 = arith.constant 15 : i32
      %43 = arith.subi %c15_i32, %arg11 : i32
      %c1_i32_29 = arith.constant 1 : i32
      %44 = arith.addi %43, %c1_i32_29 : i32
      %c15_i32_30 = arith.constant 15 : i32
      %45 = arith.minsi %44, %c15_i32_30 : i32
      %46 = arith.index_cast %45 : i32 to index
      %c0_31 = arith.constant 0 : index
      %c0_32 = arith.constant 0 : index
      %47 = vector.load %arg10[%46, %c0_31, %c0_32] : memref<16x8x8xi32, #tpu.memory_space<vmem>>, vector<1x8x8xi32>
      %48 = vector.shape_cast %47 : vector<1x8x8xi32> to vector<8x8xi32>
      %49 = vector.broadcast %arg12 : vector<1x8xi32> to vector<8x8xi32>
      %50 = arith.cmpi eq, %10, %49 : vector<8x8xi32>
      %c0_i32_33 = arith.constant 0 : i32
      %51 = vector.broadcast %c0_i32_33 : i32 to vector<8x8xi32>
      %52 = arith.select %50, %48, %51 : vector<8x8xi1>, vector<8x8xi32>
      %cst_34 = arith.constant dense<0> : vector<8xi32>
      %53 = vector.multi_reduction <add>, %52, %cst_34 [0] : vector<8x8xi32> to vector<8xi32>
      %54 = vector.shape_cast %53 : vector<8xi32> to vector<1x8xi32>
      %c1_i32_35 = arith.constant 1 : i32
      %55 = vector.broadcast %c1_i32_35 : i32 to vector<1x8xi32>
      %56 = arith.subi %39, %55 : vector<1x8xi32>
      %57 = vector.broadcast %43 : i32 to vector<1x8xi32>
      %58 = arith.cmpi eq, %56, %57 : vector<1x8xi32>
      %59 = arith.select %58, %28, %54 : vector<1x8xi1>, vector<1x8xi32>
      %60 = vector.broadcast %43 : i32 to vector<1x8xi32>
      %61 = arith.cmpi sgt, %39, %60 : vector<1x8xi32>
      %c0_i32_36 = arith.constant 0 : i32
      %62 = vector.broadcast %c0_i32_36 : i32 to vector<1x8xi32>
      %63 = arith.select %61, %59, %62 : vector<1x8xi1>, vector<1x8xi32>
      %c0_37 = arith.constant 0 : index
      %64 = arith.index_cast %43 : i32 to index
      %c0_38 = arith.constant 0 : index
      %65 = vector.load %arg8[%c0_37, %64, %c0_38] : memref<1x16x8xi32, #tpu.memory_space<vmem>>, vector<1x1x8xi32>
      %66 = vector.shape_cast %65 : vector<1x1x8xi32> to vector<1x8xi32>
      %67 = vector.shape_cast %63 : vector<1x8xi32> to vector<1x1x8xi32>
      tpu.vector_store %arg8[%c0_37, %64, %c0_38], %67 {strides = array<i32>} : memref<1x16x8xi32, #tpu.memory_space<vmem>>, vector<1x1x8xi32>,
      scf.yield %63 : vector<1x8xi32>
    }
    %c16_i32_28 = arith.constant 16 : i32
    return
  }
  func.func @transform_0(%arg0: i32) -> (i32, i32) {
    %c0_i32 = arith.constant 0 : i32
    %c0_i32_0 = arith.constant 0 : i32
    return %arg0, %c0_i32 : i32, i32
  }
  func.func @transform_1(%arg0: i32) -> (i32, i32, i32) {
    %c0_i32 = arith.constant 0 : i32
    %c0_i32_0 = arith.constant 0 : i32
    %c0_i32_1 = arith.constant 0 : i32
    return %arg0, %c0_i32, %c0_i32_0 : i32, i32, i32
  }
  func.func @transform_2(%arg0: i32) -> (i32, i32) {
    %c0_i32 = arith.constant 0 : i32
    %c0_i32_0 = arith.constant 0 : i32
    %c0_i32_1 = arith.constant 0 : i32
    return %c0_i32, %c0_i32_0 : i32, i32
  }
  func.func @transform_3(%arg0: i32) -> (i32, i32) {
    %c0_i32 = arith.constant 0 : i32
    %c0_i32_0 = arith.constant 0 : i32
    %c0_i32_1 = arith.constant 0 : i32
    return %c0_i32, %c0_i32_0 : i32, i32
  }
  func.func @transform_4(%arg0: i32) -> (i32, i32) {
    %c0_i32 = arith.constant 0 : i32
    %c0_i32_0 = arith.constant 0 : i32
    %c0_i32_1 = arith.constant 0 : i32
    return %c0_i32, %c0_i32_0 : i32, i32
  }
  func.func @transform_5(%arg0: i32) -> (i32, i32, i32) {
    %c0_i32 = arith.constant 0 : i32
    %c0_i32_0 = arith.constant 0 : i32
    %c0_i32_1 = arith.constant 0 : i32
    return %arg0, %c0_i32, %c0_i32_0 : i32, i32, i32
  }
  func.func @transform_6(%arg0: i32) -> (i32, i32, i32) {
    %c0_i32 = arith.constant 0 : i32
    %c0_i32_0 = arith.constant 0 : i32
    %c0_i32_1 = arith.constant 0 : i32
    return %arg0, %c0_i32, %c0_i32_0 : i32, i32, i32
  }
  func.func @transform_7(%arg0: i32) -> (i32, i32, i32) {
    %c0_i32 = arith.constant 0 : i32
    %c0_i32_0 = arith.constant 0 : i32
    %c0_i32_1 = arith.constant 0 : i32
    return %arg0, %c0_i32, %c0_i32_0 : i32, i32, i32
  }
}

</mosaic_0001>

<llo_original>
// kernel: tpu_custom_call.1
$region0: #{tpu_custom_call.1}
  #allocation0 [shape = 'u32[]', space=smem, size = 0x4, offset = 0x4, fixed_abs, tag = 'smem constant byte address 0x4 - core index']
  #allocation1 [shape = 'u32[144,128]{1,0:T(1,128)}', space=vmem, size = 0x12000, scoped, tag = 'internal scratch']
  #allocation2 [shape = 'f32[128,8]{1,0:T(8,128)}', space=vmem, size = 0x10000, scoped, tag = 'scratch operand']
  #allocation3 [shape = 's32[16,8,8]{2,1,0:T(8,128)}', space=vmem, size = 0x10000, scoped, tag = 'scratch operand']
  %s0 = inlined_call_operand.vmem [shape: f32[128,32], index: 0, kind: input, shape index: {}]
  %s1 = inlined_call_operand.vmem [shape: f32[1,16,8], index: 1, kind: input, shape index: {}]
  %s2 = inlined_call_operand.vmem [shape: f32[32,8], index: 2, kind: input, shape index: {}]
  %s3 = inlined_call_operand.vmem [shape: f32[1,8], index: 3, kind: input, shape index: {}]
  %s4 = inlined_call_operand.vmem [shape: f32[8,8], index: 4, kind: input, shape index: {}]
  %s5 = inlined_call_operand.hbm [shape: f32[1,1,8], index: 5, kind: output, shape index: {0}]
  %s6 = inlined_call_operand.hbm [shape: s32[1,1,8], index: 6, kind: output, shape index: {1}]
  %s7 = inlined_call_operand.vmem [shape: s32[1,16,8], index: 7, kind: output, shape index: {2}]
  %8 = xla_tuple %s5, %s6, %s7
  %s9 = sld [smem:[#allocation0]]
  $region60: #{tpu_custom_call.1} parent=0
    _
  %s11 = ssub.s32 1, %s9
  %s12 = scalar_select 0, %s11, %s9
  $region1: #{tpu_custom_call.1} parent=0
    #allocation4 [shape = 'u8[512]{0}', space=vmem, size = 0x400, scoped, tag = 'output window, operand 0, single buffered']
    #allocation5 [shape = 's32[1]{0}', space=sflag, size = 0x4, scoped, tag = 'scoped memory for tpu_custom_call.1']
    #allocation6 [shape = 'u8[512]{0}', space=vmem, size = 0x400, scoped, tag = 'output window, operand 1, single buffered']
    #allocation7 [shape = 's32[1]{0}', space=sflag, size = 0x4, scoped, tag = 'scoped memory for tpu_custom_call.1']
    %13 = vsyncpa [#allocation5], 0
    %14 = vsyncpa [#allocation7], 0
    // Predicated region
    $region2: #{tpu_custom_call.1} parent=1 // pred_check
      _
    $region3: #{tpu_custom_call.1} parent=1 // pred_check_branch
      %16 = sbr.rel (0) target = $region5
    $region4: #{tpu_custom_call.1} parent=1 // pred_region
      _
    $region5: #{tpu_custom_call.1} parent=1 // pred_fallthru
      _
    // Predicated region
    $region6: #{tpu_custom_call.1} parent=1 // pred_check
      _
    $region7: #{tpu_custom_call.1} parent=1 // pred_check_branch
      %18 = sbr.rel (0) target = $region9
    $region8: #{tpu_custom_call.1} parent=1 // pred_region
      _
    $region9: #{tpu_custom_call.1} parent=1 // pred_fallthru
      _
    // Predicated region
    $region10: #{tpu_custom_call.1} parent=1 // pred_check
      _
    $region11: #{tpu_custom_call.1} parent=1 // pred_check_branch
      %20 = sbr.rel (0) target = $region13
    $region12: #{tpu_custom_call.1} parent=1 // pred_region
      _
    $region13: #{tpu_custom_call.1} parent=1 // pred_fallthru
      _
    // Predicated region
    $region14: #{tpu_custom_call.1} parent=1 // pred_check
      _
    $region15: #{tpu_custom_call.1} parent=1 // pred_check_branch
      %22 = sbr.rel (0) target = $region17
    $region16: #{tpu_custom_call.1} parent=1 // pred_region
      _
    $region17: #{tpu_custom_call.1} parent=1 // pred_fallthru
      _
    // Predicated region
    $region18: #{tpu_custom_call.1} parent=1 // pred_check
      _
    $region19: #{tpu_custom_call.1} parent=1 // pred_check_branch
      %24 = sbr.rel (0) target = $region21
    $region20: #{tpu_custom_call.1} parent=1 // pred_region
      _
    $region21: #{tpu_custom_call.1} parent=1 // pred_fallthru
      _
    %v26 = vld [vmem:[%s0] sm:$0xff]
    %v27 = vld [vmem:[%s0 + $0x8] sm:$0xff]
    %v28 = vld [vmem:[%s0 + $0x10] sm:$0xff]
    %v29 = vld [vmem:[%s0 + $0x18] sm:$0xff]
    %v30 = vld [vmem:[%s0 + $0x20] sm:$0xff]
    %v31 = vld [vmem:[%s0 + $0x28] sm:$0xff]
    %v32 = vld [vmem:[%s0 + $0x30] sm:$0xff]
    %v33 = vld [vmem:[%s0 + $0x38] sm:$0xff]
    %v34 = vld [vmem:[%s0 + $0x40] sm:$0xff]
    %v35 = vld [vmem:[%s0 + $0x48] sm:$0xff]
    %v36 = vld [vmem:[%s0 + $0x50] sm:$0xff]
    %v37 = vld [vmem:[%s0 + $0x58] sm:$0xff]
    %v38 = vld [vmem:[%s0 + $0x60] sm:$0xff]
    %v39 = vld [vmem:[%s0 + $0x68] sm:$0xff]
    %v40 = vld [vmem:[%s0 + $0x70] sm:$0xff]
    %v41 = vld [vmem:[%s0 + $0x78] sm:$0xff]
    %v42 = vpack.c.bf16 %v27, %v26
    %v43 = vpack.c.bf16 %v29, %v28
    %v44 = vpack.c.bf16 %v31, %v30
    %v45 = vpack.c.bf16 %v33, %v32
    %v46 = vpack.c.bf16 %v35, %v34
    %v47 = vpack.c.bf16 %v37, %v36
    %v48 = vpack.c.bf16 %v39, %v38
    %v49 = vpack.c.bf16 %v41, %v40
    %v50 = vld [vmem:[%s2] sm:$0xff]
    %v51 = vld [vmem:[%s2 + $0x8] sm:$0xff]
    %v52 = vld [vmem:[%s2 + $0x10] sm:$0xff]
    %v53 = vld [vmem:[%s2 + $0x18] sm:$0xff]
    %v54 = vpack.c.bf16 %v51, %v50
    %v55 = vpack.c.bf16 %v53, %v52
    %v56 = vld [vmem:[%s3] sm:$0x1]
    %v58 = vlaneseq
    %v59 = vshrl.u32 %v58, 7
    %v60 = vsub.s32 0, %v59
    %v61 = vrot.slane %v56, %v60
    %vm63 = vcmask 261120
    %v65 = vsel %vm63, %v42, 0
    %v68 = vsel %vm63, %v43, 0
    %v71 = vsel %vm63, %v44, 0
    %v74 = vsel %vm63, %v45, 0
    %v77 = vsel %vm63, %v46, 0
    %v80 = vsel %vm63, %v47, 0
    %v83 = vsel %vm63, %v48, 0
    %v86 = vsel %vm63, %v49, 0
    %88 = vmatprep.subr.bf16.mxu0 0
    %89 = vmatpush1.bf16.msra.mxu0 %v54
    %90 = vmatprep.subr.bf16.mxu0 0
    %91 = vmatpush1.bf16.msra.mxu0 %v55
    %92 = vmatprep.subr.bf16.mxu0 0
    %93 = vmatpush1.bf16.msra.mxu0 0
    %94 = vmatprep.subr.bf16.mxu0 0
    %95 = vmatpush1.bf16.msra.mxu0 0
    %96 = vmatprep.subr.bf16.mxu0 0
    %97 = vmatpush1.bf16.msra.mxu0 0
    %98 = vmatprep.subr.bf16.mxu0 0
    %99 = vmatpush1.bf16.msra.mxu0 0
    %100 = vmatprep.subr.bf16.mxu0 0
    %101 = vmatpush1.bf16.msra.mxu0 0
    %102 = vmatprep.subr.bf16.mxu0 0
    %103 = vmatpush1.bf16.msra.mxu0 0
    %104 = vmatprep.subr.bf16.mxu0 0
    %105 = vmatpush1.bf16.msra.mxu0 0
    %106 = vmatprep.subr.bf16.mxu0 0
    %107 = vmatpush1.bf16.msra.mxu0 0
    %108 = vmatprep.subr.bf16.mxu0 0
    %109 = vmatpush1.bf16.msra.mxu0 0
    %110 = vmatprep.subr.bf16.mxu0 0
    %111 = vmatpush1.bf16.msra.mxu0 0
    %112 = vmatprep.subr.bf16.mxu0 0
    %113 = vmatpush1.bf16.msra.mxu0 0
    %114 = vmatprep.subr.bf16.mxu0 0
    %115 = vmatpush1.bf16.msra.mxu0 0
    %116 = vmatprep.subr.bf16.mxu0 0
    %117 = vmatpush1.bf16.msra.mxu0 0
    %118 = vmatprep.subr.bf16.mxu0 0
    %119 = vmatpush1.bf16.msra.mxu0 0
    %120 = vmatprep.mubr.bf16.mxu0 0
    %121 = vmatmul.mubr.bf16.gmra.mrb[0].mxu0 %v65
    %v122 = vpop.f32.mrb[0].mxu0
    %v123 = vadd.f32 %v61, %v122
    %v124 = vpop.f32.mrb[0].mxu0
    %v125 = vpop.f32.mrb[0].mxu0
    %v126 = vadd.f32 %v61, %v125
    %v127 = vpop.f32.mrb[0].mxu0
    %128 = vmatprep.mubr.bf16.mxu0 0
    %129 = vmatmul.mubr.bf16.gmra.mrb[0].mxu0 %v68
    %v130 = vpop.f32.mrb[0].mxu0
    %v131 = vadd.f32 %v61, %v130
    %v132 = vpop.f32.mrb[0].mxu0
    %v133 = vpop.f32.mrb[0].mxu0
    %v134 = vadd.f32 %v61, %v133
    %v135 = vpop.f32.mrb[0].mxu0
    %136 = vmatprep.mubr.bf16.mxu0 0
    %137 = vmatmul.mubr.bf16.gmra.mrb[0].mxu0 %v71
    %v138 = vpop.f32.mrb[0].mxu0
    %v139 = vadd.f32 %v61, %v138
    %v140 = vpop.f32.mrb[0].mxu0
    %v141 = vpop.f32.mrb[0].mxu0
    %v142 = vadd.f32 %v61, %v141
    %v143 = vpop.f32.mrb[0].mxu0
    %144 = vmatprep.mubr.bf16.mxu0 0
    %145 = vmatmul.mubr.bf16.gmra.mrb[0].mxu0 %v74
    %v146 = vpop.f32.mrb[0].mxu0
    %v147 = vadd.f32 %v61, %v146
    %v148 = vpop.f32.mrb[0].mxu0
    %v149 = vpop.f32.mrb[0].mxu0
    %v150 = vadd.f32 %v61, %v149
    %v151 = vpop.f32.mrb[0].mxu0
    %152 = vmatprep.mubr.bf16.mxu0 0
    %153 = vmatmul.mubr.bf16.gmra.mrb[0].mxu0 %v77
    %v154 = vpop.f32.mrb[0].mxu0
    %v155 = vadd.f32 %v61, %v154
    %v156 = vpop.f32.mrb[0].mxu0
    %v157 = vpop.f32.mrb[0].mxu0
    %v158 = vadd.f32 %v61, %v157
    %v159 = vpop.f32.mrb[0].mxu0
    %160 = vmatprep.mubr.bf16.mxu0 0
    %161 = vmatmul.mubr.bf16.gmra.mrb[0].mxu0 %v80
    %v162 = vpop.f32.mrb[0].mxu0
    %v163 = vadd.f32 %v61, %v162
    %v164 = vpop.f32.mrb[0].mxu0
    %v165 = vpop.f32.mrb[0].mxu0
    %v166 = vadd.f32 %v61, %v165
    %v167 = vpop.f32.mrb[0].mxu0
    %168 = vmatprep.mubr.bf16.mxu0 0
    %169 = vmatmul.mubr.bf16.gmra.mrb[0].mxu0 %v83
    %v170 = vpop.f32.mrb[0].mxu0
    %v171 = vadd.f32 %v61, %v170
    %v172 = vpop.f32.mrb[0].mxu0
    %v173 = vpop.f32.mrb[0].mxu0
    %v174 = vadd.f32 %v61, %v173
    %v175 = vpop.f32.mrb[0].mxu0
    %176 = vmatprep.mubr.bf16.mxu0 0
    %177 = vmatmul.mubr.bf16.gmra.mrb[0].mxu0 %v86
    %v178 = vpop.f32.mrb[0].mxu0
    %v179 = vadd.f32 %v61, %v178
    %v180 = vpop.f32.mrb[0].mxu0
    %v181 = vpop.f32.mrb[0].mxu0
    %v182 = vadd.f32 %v61, %v181
    %v183 = vpop.f32.mrb[0].mxu0
    %184 = vdwg.mxu0
    %vm185 = vcmask 64512
    %186 = vst.msk [vmem:[#allocation2] sm:$0xff] %vm185, %v123
    %187 = vst.msk [vmem:[#allocation2 + $0x8] sm:$0xff] %vm185, %v126
    %188 = vst.msk [vmem:[#allocation2 + $0x10] sm:$0xff] %vm185, %v131
    %189 = vst.msk [vmem:[#allocation2 + $0x18] sm:$0xff] %vm185, %v134
    %190 = vst.msk [vmem:[#allocation2 + $0x20] sm:$0xff] %vm185, %v139
    %191 = vst.msk [vmem:[#allocation2 + $0x28] sm:$0xff] %vm185, %v142
    %192 = vst.msk [vmem:[#allocation2 + $0x30] sm:$0xff] %vm185, %v147
    %193 = vst.msk [vmem:[#allocation2 + $0x38] sm:$0xff] %vm185, %v150
    %194 = vst.msk [vmem:[#allocation2 + $0x40] sm:$0xff] %vm185, %v155
    %195 = vst.msk [vmem:[#allocation2 + $0x48] sm:$0xff] %vm185, %v158
    %196 = vst.msk [vmem:[#allocation2 + $0x50] sm:$0xff] %vm185, %v163
    %197 = vst.msk [vmem:[#allocation2 + $0x58] sm:$0xff] %vm185, %v166
    %198 = vst.msk [vmem:[#allocation2 + $0x60] sm:$0xff] %vm185, %v171
    %199 = vst.msk [vmem:[#allocation2 + $0x68] sm:$0xff] %vm185, %v174
    %200 = vst.msk [vmem:[#allocation2 + $0x70] sm:$0xff] %vm185, %v179
    %201 = vst.msk [vmem:[#allocation2 + $0x78] sm:$0xff] %vm185, %v182
    %v202 = vld [vmem:[%s4] sm:$0xff]
    %v203 = vlaneseq
    %v204 = vshrl.u32 %v203, 7
    %vm205 = vcmp.eq.s32.totalorder %v204, 6
    %v206 = vsel %vm205, 0.0, -10000.0
    loop: start=0, step=1, limit=16
    $region22: #{tpu_custom_call.1} parent=1 // loop_pre_header
      _
    $region23: #{tpu_custom_call.1} parent=1 // loop_header
      %s208 = sphi 0, %s212
      %p209 = scmp.ge.s32.totalorder %s208, 16
      %v213 = vphi %v206, %v481
    $region24: #{tpu_custom_call.1} parent=1 // loop_header_branch
      %211 = sbr.rel (%p209) target = $region28
    $region25: #{tpu_custom_call.1} parent=1 // loop_body
      %215 = vset.pattern.permute.xlu0 0
      %216 = vperm.xlu0 %215, %v202
      %v217 = vpop.permute.xlu0 %216
      %v219 = vadd.f32 %v213, %v217
      %v220 = vsel %vm185, %v219, -inf
      %v221 = vrot.slane %v220, 4
      %v222 = vmax.f32 %v220, %v221
      %v223 = vrot.slane %v222, 2
      %v224 = vmax.f32 %v222, %v223
      %v225 = vrot.slane %v224, 1
      %v226 = vmax.f32 %v224, %v225
      %vm227 = vcmp.eq.f32.partialorder %v219, %v226
      %v228 = vsel %vm227, %v204, 8
      %v229 = vsel %vm185, %v228, 2147483647
      %v230 = vrot.slane %v229, 4
      %vm231 = vcmp.lt.s32.totalorder %v229, %v230
      %v232 = vsel %vm231, %v229, %v230
      %v233 = vrot.slane %v232, 2
      %vm234 = vcmp.lt.s32.totalorder %v232, %v233
      %v235 = vsel %vm234, %v232, %v233
      %v236 = vrot.slane %v235, 1
      %vm237 = vcmp.lt.s32.totalorder %v235, %v236
      %v238 = vsel %vm237, %v235, %v236
      %239 = vset.pattern.permute.xlu0 1
      %240 = vperm.xlu0 %239, %v202
      %v241 = vpop.permute.xlu0 %240
      %v243 = vadd.f32 %v213, %v241
      %v244 = vsel %vm185, %v243, -inf
      %v245 = vrot.slane %v244, 4
      %v246 = vmax.f32 %v244, %v245
      %v247 = vrot.slane %v246, 2
      %v248 = vmax.f32 %v246, %v247
      %v249 = vrot.slane %v248, 1
      %v250 = vmax.f32 %v248, %v249
      %vm251 = vcmp.eq.f32.partialorder %v243, %v250
      %v252 = vsel %vm251, %v204, 8
      %v253 = vsel %vm185, %v252, 2147483647
      %v254 = vrot.slane %v253, 4
      %vm255 = vcmp.lt.s32.totalorder %v253, %v254
      %v256 = vsel %vm255, %v253, %v254
      %v257 = vrot.slane %v256, 2
      %vm258 = vcmp.lt.s32.totalorder %v256, %v257
      %v259 = vsel %vm258, %v256, %v257
      %v260 = vrot.slane %v259, 1
      %vm261 = vcmp.lt.s32.totalorder %v259, %v260
      %v262 = vsel %vm261, %v259, %v260
      %263 = vset.pattern.permute.xlu0 2
      %264 = vperm.xlu0 %263, %v202
      %v265 = vpop.permute.xlu0 %264
      %v267 = vadd.f32 %v213, %v265
      %v268 = vsel %vm185, %v267, -inf
      %v269 = vrot.slane %v268, 4
      %v270 = vmax.f32 %v268, %v269
      %v271 = vrot.slane %v270, 2
      %v272 = vmax.f32 %v270, %v271
      %v273 = vrot.slane %v272, 1
      %v274 = vmax.f32 %v272, %v273
      %vm275 = vcmp.eq.f32.partialorder %v267, %v274
      %v276 = vsel %vm275, %v204, 8
      %v277 = vsel %vm185, %v276, 2147483647
      %v278 = vrot.slane %v277, 4
      %vm279 = vcmp.lt.s32.totalorder %v277, %v278
      %v280 = vsel %vm279, %v277, %v278
      %v281 = vrot.slane %v280, 2
      %vm282 = vcmp.lt.s32.totalorder %v280, %v281
      %v283 = vsel %vm282, %v280, %v281
      %v284 = vrot.slane %v283, 1
      %vm285 = vcmp.lt.s32.totalorder %v283, %v284
      %v286 = vsel %vm285, %v283, %v284
      %287 = vset.pattern.permute.xlu0 3
      %288 = vperm.xlu0 %287, %v202
      %v289 = vpop.permute.xlu0 %288
      %v291 = vadd.f32 %v213, %v289
      %v292 = vsel %vm185, %v291, -inf
      %v293 = vrot.slane %v292, 4
      %v294 = vmax.f32 %v292, %v293
      %v295 = vrot.slane %v294, 2
      %v296 = vmax.f32 %v294, %v295
      %v297 = vrot.slane %v296, 1
      %v298 = vmax.f32 %v296, %v297
      %vm299 = vcmp.eq.f32.partialorder %v291, %v298
      %v300 = vsel %vm299, %v204, 8
      %v301 = vsel %vm185, %v300, 2147483647
      %v302 = vrot.slane %v301, 4
      %vm303 = vcmp.lt.s32.totalorder %v301, %v302
      %v304 = vsel %vm303, %v301, %v302
      %v305 = vrot.slane %v304, 2
      %vm306 = vcmp.lt.s32.totalorder %v304, %v305
      %v307 = vsel %vm306, %v304, %v305
      %v308 = vrot.slane %v307, 1
      %vm309 = vcmp.lt.s32.totalorder %v307, %v308
      %v310 = vsel %vm309, %v307, %v308
      %311 = vset.pattern.permute.xlu0 4
      %312 = vperm.xlu0 %311, %v202
      %v313 = vpop.permute.xlu0 %312
      %v315 = vadd.f32 %v213, %v313
      %v316 = vsel %vm185, %v315, -inf
      %v317 = vrot.slane %v316, 4
      %v318 = vmax.f32 %v316, %v317
      %v319 = vrot.slane %v318, 2
      %v320 = vmax.f32 %v318, %v319
      %v321 = vrot.slane %v320, 1
      %v322 = vmax.f32 %v320, %v321
      %vm323 = vcmp.eq.f32.partialorder %v315, %v322
      %v324 = vsel %vm323, %v204, 8
      %v325 = vsel %vm185, %v324, 2147483647
      %v326 = vrot.slane %v325, 4
      %vm327 = vcmp.lt.s32.totalorder %v325, %v326
      %v328 = vsel %vm327, %v325, %v326
      %v329 = vrot.slane %v328, 2
      %vm330 = vcmp.lt.s32.totalorder %v328, %v329
      %v331 = vsel %vm330, %v328, %v329
      %v332 = vrot.slane %v331, 1
      %vm333 = vcmp.lt.s32.totalorder %v331, %v332
      %v334 = vsel %vm333, %v331, %v332
      %335 = vset.pattern.permute.xlu0 5
      %336 = vperm.xlu0 %335, %v202
      %v337 = vpop.permute.xlu0 %336
      %v339 = vadd.f32 %v213, %v337
      %v340 = vsel %vm185, %v339, -inf
      %v341 = vrot.slane %v340, 4
      %v342 = vmax.f32 %v340, %v341
      %v343 = vrot.slane %v342, 2
      %v344 = vmax.f32 %v342, %v343
      %v345 = vrot.slane %v344, 1
      %v346 = vmax.f32 %v344, %v345
      %vm347 = vcmp.eq.f32.partialorder %v339, %v346
      %v348 = vsel %vm347, %v204, 8
      %v349 = vsel %vm185, %v348, 2147483647
      %v350 = vrot.slane %v349, 4
      %vm351 = vcmp.lt.s32.totalorder %v349, %v350
      %v352 = vsel %vm351, %v349, %v350
      %v353 = vrot.slane %v352, 2
      %vm354 = vcmp.lt.s32.totalorder %v352, %v353
      %v355 = vsel %vm354, %v352, %v353
      %v356 = vrot.slane %v355, 1
      %vm357 = vcmp.lt.s32.totalorder %v355, %v356
      %v358 = vsel %vm357, %v355, %v356
      %359 = vset.pattern.permute.xlu0 6
      %360 = vperm.xlu0 %359, %v202
      %v361 = vpop.permute.xlu0 %360
      %v363 = vadd.f32 %v213, %v361
      %v364 = vsel %vm185, %v363, -inf
      %v365 = vrot.slane %v364, 4
      %v366 = vmax.f32 %v364, %v365
      %v367 = vrot.slane %v366, 2
      %v368 = vmax.f32 %v366, %v367
      %v369 = vrot.slane %v368, 1
      %v370 = vmax.f32 %v368, %v369
      %vm371 = vcmp.eq.f32.partialorder %v363, %v370
      %v372 = vsel %vm371, %v204, 8
      %v373 = vsel %vm185, %v372, 2147483647
      %v374 = vrot.slane %v373, 4
      %vm375 = vcmp.lt.s32.totalorder %v373, %v374
      %v376 = vsel %vm375, %v373, %v374
      %v377 = vrot.slane %v376, 2
      %vm378 = vcmp.lt.s32.totalorder %v376, %v377
      %v379 = vsel %vm378, %v376, %v377
      %v380 = vrot.slane %v379, 1
      %vm381 = vcmp.lt.s32.totalorder %v379, %v380
      %v382 = vsel %vm381, %v379, %v380
      %383 = vset.pattern.permute.xlu0 7
      %384 = vperm.xlu0 %383, %v202
      %v385 = vpop.permute.xlu0 %384
      %v387 = vadd.f32 %v213, %v385
      %v388 = vsel %vm185, %v387, -inf
      %v389 = vrot.slane %v388, 4
      %v390 = vmax.f32 %v388, %v389
      %v391 = vrot.slane %v390, 2
      %v392 = vmax.f32 %v390, %v391
      %v393 = vrot.slane %v392, 1
      %v394 = vmax.f32 %v392, %v393
      %vm395 = vcmp.eq.f32.partialorder %v387, %v394
      %v396 = vsel %vm395, %v204, 8
      %v397 = vsel %vm185, %v396, 2147483647
      %v398 = vrot.slane %v397, 4
      %vm399 = vcmp.lt.s32.totalorder %v397, %v398
      %v400 = vsel %vm399, %v397, %v398
      %v401 = vrot.slane %v400, 2
      %vm402 = vcmp.lt.s32.totalorder %v400, %v401
      %v403 = vsel %vm402, %v400, %v401
      %v404 = vrot.slane %v403, 1
      %vm405 = vcmp.lt.s32.totalorder %v403, %v404
      %v406 = vsel %vm405, %v403, %v404
      %vm407 = vcmask 1040384
      %v408 = vsel %vm407, %v226, %v250
      %vm409 = vcmask 1041408
      %v410 = vsel %vm409, %v408, %v274
      %vm411 = vcmask 1042432
      %v412 = vsel %vm411, %v410, %v298
      %vm413 = vcmask 1043456
      %v414 = vsel %vm413, %v412, %v322
      %vm415 = vcmask 1044480
      %v416 = vsel %vm415, %v414, %v346
      %vm417 = vcmask 1045504
      %v418 = vsel %vm417, %v416, %v370
      %vm419 = vcmask 1046528
      %v420 = vsel %vm419, %v418, %v394
      %v421 = vsel %vm407, %v238, %v262
      %v422 = vsel %vm409, %v421, %v286
      %v423 = vsel %vm411, %v422, %v310
      %v424 = vsel %vm413, %v423, %v334
      %v425 = vsel %vm415, %v424, %v358
      %v426 = vsel %vm417, %v425, %v382
      %v427 = vsel %vm419, %v426, %v406
      %s428 = smul.u32 %s208, 8
      %s429 = scalar_lea.vmem [#allocation3], %s428
      %430 = vst.msk [vmem:[%s429] sm:$0xff] %vm185, %v427
      %s431 = scalar_lea.vmem [#allocation2], %s208
      %v432 = vld [vmem:[%s431] ss:$16 sm:$0x3]
      %v433 = vld [vmem:[%s431] ss:$16 sm:$0xc]
      %v434 = vor.u32 %v432, %v433
      %v435 = vld [vmem:[%s431] ss:$16 sm:$0x30]
      %v436 = vor.u32 %v434, %v435
      %v437 = vld [vmem:[%s431] ss:$16 sm:$0xc0]
      %v438 = vor.u32 %v436, %v437
      %439 = vxpose.xlu0.b32.start [1/16] %v438, 128
      %440 = vxpose.xlu0.b32.cont [2/16] 0.0, 128
      %441 = vxpose.xlu0.b32.cont [3/16] 0.0, 128
      %442 = vxpose.xlu0.b32.cont [4/16] 0.0, 128
      %443 = vxpose.xlu0.b32.cont [5/16] 0.0, 128
      %444 = vxpose.xlu0.b32.cont [6/16] 0.0, 128
      %445 = vxpose.xlu0.b32.cont [7/16] 0.0, 128
      %446 = vxpose.xlu0.b32.cont [8/16] 0.0, 128
      %447 = vxpose.xlu0.b32.cont [9/16] 0.0, 128
      %448 = vxpose.xlu0.b32.cont [10/16] 0.0, 128
      %449 = vxpose.xlu0.b32.cont [11/16] 0.0, 128
      %450 = vxpose.xlu0.b32.cont [12/16] 0.0, 128
      %451 = vxpose.xlu0.b32.cont [13/16] 0.0, 128
      %452 = vxpose.xlu0.b32.cont [14/16] 0.0, 128
      %453 = vxpose.xlu0.b32.cont [15/16] 0.0, 128
      %454 = vxpose.xlu0.b32.end [16/16] 0.0, 128
      %v455 = vpop.trf.xlu0
      %v456 = vpop.trf.xlu0
      %v457 = vpop.trf.xlu0
      %v458 = vpop.trf.xlu0
      %v459 = vpop.trf.xlu0
      %v460 = vpop.trf.xlu0
      %v461 = vpop.trf.xlu0
      %v462 = vpop.trf.xlu0
      %v463 = vpop.trf.xlu0
      %v464 = vpop.trf.xlu0
      %v465 = vpop.trf.xlu0
      %v466 = vpop.trf.xlu0
      %v467 = vpop.trf.xlu0
      %v468 = vpop.trf.xlu0
      %v469 = vpop.trf.xlu0
      %v470 = vpop.trf.xlu0
      %v471 = vadd.f32 %v420, %v455
      %s472 = scalar_lea.vmem %s1, %s208
      %v473 = vld [vmem:[%s472] sm:$0x1]
      %vm474 = vcmp.gt.f32.partialorder %v473, 0.0
      %v475 = vsel %vm474, 1, 0
      %v476 = vlaneseq
      %v477 = vshrl.u32 %v476, 7
      %v478 = vsub.s32 0, %v477
      %v479 = vrot.slane %v475, %v478
      %vm480 = vcmp.eq.s32.totalorder %v479, 1
      %v481 = vsel %vm480, %v471, %v213
    $region26: #{tpu_custom_call.1} parent=1 // loop_footer
      %s212 = sadd.s32 1, %s208
    $region27: #{tpu_custom_call.1} parent=1 // loop_footer_branch
      %207 = sbr.rel target = $region23
    $region28: #{tpu_custom_call.1} parent=1 // loop_exit
      _
    %483 = vset.pattern.permute.xlu0 7
    %484 = vperm.xlu0 %483, %v202
    %v485 = vpop.permute.xlu0 %484
    %v487 = vadd.f32 %v213, %v485
    %v488 = vsel %vm185, %v487, -inf
    %v489 = vrot.slane %v488, 4
    %v490 = vmax.f32 %v488, %v489
    %v491 = vrot.slane %v490, 2
    %v492 = vmax.f32 %v490, %v491
    %v493 = vrot.slane %v492, 1
    %v494 = vmax.f32 %v492, %v493
    %vm495 = vcmp.eq.f32.partialorder %v487, %v494
    %v496 = vsel %vm495, %v204, 8
    %v497 = vsel %vm185, %v496, 2147483647
    %v498 = vrot.slane %v497, 4
    %vm499 = vcmp.lt.s32.totalorder %v497, %v498
    %v500 = vsel %vm499, %v497, %v498
    %v501 = vrot.slane %v500, 2
    %vm502 = vcmp.lt.s32.totalorder %v500, %v501
    %v503 = vsel %vm502, %v500, %v501
    %v504 = vrot.slane %v503, 1
    %vm505 = vcmp.lt.s32.totalorder %v503, %v504
    %v506 = vsel %vm505, %v503, %v504
    %vm507 = vcmask 57344
    %508 = vst.msk [vmem:[#allocation4] sm:$0x1] %vm507, %v494
    %509 = vst.msk [vmem:[#allocation6] sm:$0x1] %vm507, %v506
    %v510 = vld [vmem:[%s1] sm:$0xff]
    %v511 = vld [vmem:[%s1 + $0x8] sm:$0xff]
    %v512 = vsel %vm185, %v510, 0.0
    %v513 = vsel %vm185, %v511, 0.0
    %v514 = vadd.f32 %v512, %v513
    %v515 = vrot.slane %v514, 4
    %v516 = vadd.f32 %v514, %v515
    %v517 = vrot.slane %v516, 2
    %v518 = vadd.f32 %v516, %v517
    %v519 = vrot.slane %v518, 1
    %v520 = vadd.f32 %v518, %v519
    %v521 = vcvt.f32.s32.to.zero.pseudo %v520
    loop: start=0, step=1, limit=16
    $region29: #{tpu_custom_call.1} parent=1 // loop_pre_header
      _
    $region30: #{tpu_custom_call.1} parent=1 // loop_header
      %s523 = sphi 0, %s527
      %p524 = scmp.ge.s32.totalorder %s523, 16
      %v528 = vphi 0, %v550
    $region31: #{tpu_custom_call.1} parent=1 // loop_header_branch
      %526 = sbr.rel (%p524) target = $region35
    $region32: #{tpu_custom_call.1} parent=1 // loop_body
      %s529 = ssub.s32 15, %s523
      %s530 = ssub.s32 16, %s523
      %p531 = scmp.lt.s32.totalorder %s530, 15
      %s532 = scalar_select %p531, %s530, 15
      %s533 = smul.u32 %s532, 8
      %s534 = scalar_lea.vmem [#allocation3], %s533
      %v535 = vld [vmem:[%s534] sm:$0xff]
      %vm536 = vcmp.eq.s32.totalorder %v204, %v528
      %v537 = vsel %vm536, %v535, 0
      %v538 = vsel %vm185, %v537, 0
      %v539 = vrot.slane %v538, 4
      %v540 = vadd.s32 %v538, %v539
      %v541 = vrot.slane %v540, 2
      %v542 = vadd.s32 %v540, %v541
      %v543 = vrot.slane %v542, 1
      %v544 = vadd.s32 %v542, %v543
      %v545 = vsub.s32 %v521, 1
      %v546 = vstv %s529
      %vm547 = vcmp.eq.s32.totalorder %v545, %v546
      %v548 = vsel %vm547, %v506, %v544
      %vm549 = vcmp.gt.s32.totalorder %v521, %v546
      %v550 = vsel %vm549, %v548, 0
      %s551 = scalar_lea.vmem %s7, %s529
      %552 = vst.msk [vmem:[%s551] sm:$0x1] %vm507, %v550
    $region33: #{tpu_custom_call.1} parent=1 // loop_footer
      %s527 = sadd.s32 1, %s523
    $region34: #{tpu_custom_call.1} parent=1 // loop_footer_branch
      %522 = sbr.rel target = $region30
    $region35: #{tpu_custom_call.1} parent=1 // loop_exit
      _
    // Predicated region
    $region36: #{tpu_custom_call.1} parent=1 // pred_check
      _
    $region37: #{tpu_custom_call.1} parent=1 // pred_check_branch
      %554 = sbr.rel (0) target = $region39
    $region38: #{tpu_custom_call.1} parent=1 // pred_region
      %s556 = ssub.s32 16, 16
      %557 = vsyncadd [#allocation5], %s556
      %s559 = sshll.u32 [#allocation4], 4
      %s560 = int_to_ptr.vmem [resolvable:$true] %s559
      %562 = dma.vmem_to_hbm [thread:$0]  %s560, 16, %s5, [#allocation5]
    $region39: #{tpu_custom_call.1} parent=1 // pred_fallthru
      _
    // Predicated region
    $region40: #{tpu_custom_call.1} parent=1 // pred_check
      _
    $region41: #{tpu_custom_call.1} parent=1 // pred_check_branch
      %564 = sbr.rel (0) target = $region43
    $region42: #{tpu_custom_call.1} parent=1 // pred_region
      %s566 = ssub.s32 16, 16
      %567 = vsyncadd [#allocation7], %s566
      %s569 = sshll.u32 [#allocation6], 4
      %s570 = int_to_ptr.vmem [resolvable:$true] %s569
      %572 = dma.vmem_to_hbm [thread:$0]  %s570, 16, %s6, [#allocation7]
    $region43: #{tpu_custom_call.1} parent=1 // pred_fallthru
      _
    // Predicated region
    $region44: #{tpu_custom_call.1} parent=1 // pred_check
      _
    $region45: #{tpu_custom_call.1} parent=1 // pred_check_branch
      %574 = sbr.rel (0) target = $region47
    $region46: #{tpu_custom_call.1} parent=1 // pred_region
      _
    $region47: #{tpu_custom_call.1} parent=1 // pred_fallthru
      _
    // Predicated region
    $region48: #{tpu_custom_call.1} parent=1 // pred_check
      _
    $region49: #{tpu_custom_call.1} parent=1 // pred_check_branch
      %576 = sbr.rel (0) target = $region51
    $region50: #{tpu_custom_call.1} parent=1 // pred_region
      %577 = dma.done [#allocation5], 16
    $region51: #{tpu_custom_call.1} parent=1 // pred_fallthru
      _
    // Predicated region
    $region52: #{tpu_custom_call.1} parent=1 // pred_check
      _
    $region53: #{tpu_custom_call.1} parent=1 // pred_check_branch
      %579 = sbr.rel (0) target = $region55
    $region54: #{tpu_custom_call.1} parent=1 // pred_region
      %580 = dma.done [#allocation7], 16
    $region55: #{tpu_custom_call.1} parent=1 // pred_fallthru
      _
    // Predicated region
    $region56: #{tpu_custom_call.1} parent=1 // pred_check
      _
    $region57: #{tpu_custom_call.1} parent=1 // pred_check_branch
      %582 = sbr.rel (0) target = $region59
    $region58: #{tpu_custom_call.1} parent=1 // pred_region
      _
    $region59: #{tpu_custom_call.1} parent=1 // pred_fallthru
      _
    %583 = vsyncpa [#allocation5], 1
    %584 = vsyncpa [#allocation7], 1

</llo_original>
